<compile_context>
chip_gen: v6e
topology: v6e:2x2x1
jax: 0.10.0
libtpu: 0.0.40
codegen_flags: <defaults>
</compile_context>

<pallas_src>
import functools

import jax
import jax.numpy as jnp
from jax.experimental import pallas as pl
from jax.experimental.pallas import tpu as pltpu


# ---------------------------------------------------------------------------
# Tile selection helpers
# ---------------------------------------------------------------------------
def _choose_channel_tile(C):
    """Channel tile: a multiple of 128 that divides C; 2 tiles when cleanly
    possible so the 'parallel' channel axis can be sharded across v7x's two
    TensorCores. Falls back to the full dim (always legal) otherwise."""
    if C % 256 == 0:
        return C // 2
    return C


def _choose_token_tile(B, N, tc, dtype_bytes, target_bytes=4 * 1024 * 1024):
    """Token tile: keep each (B, tn, tc) input block around ~4 MiB so the
    double-buffered working set is well under scoped-VMEM defaults on
    v5e/v6e/v7x while being large enough to approach the HBM roofline.
    Prefers a tile that divides N exactly (avoids the masked ragged tile)."""
    row_bytes = max(1, B * tc * dtype_bytes)
    max_tn = target_bytes // row_bytes
    if max_tn >= N:
        return N                       # whole token axis fits in one block
    t = max(8, (max_tn // 8) * 8)      # sublane-aligned upper bound
    # Prefer the largest sublane-aligned divisor of N that is <= t (and not
    # so small that per-step overhead dominates); otherwise use t + masking.
    for cand in range(t, 7, -8):
        if N % cand == 0:
            if cand >= max(8, t // 2):
                return cand
            break
    return t


# ---------------------------------------------------------------------------
# op='avg' : mean over the token axis.
# Grid = (channel tiles [parallel], token tiles [arbitrary/reduction]).
# float32 VMEM accumulator: zeroed at the first token tile, scaled by 1/N and
# written back at the last token tile (P3 accumulator pattern).
# ---------------------------------------------------------------------------
def _head_avg_kernel(x_ref, o_ref, acc_ref, *, n_total, tn):
    k = pl.program_id(1)  # token (reduction) axis is the last grid axis

    @pl.when(k == 0)
    def _():
        acc_ref[...] = jnp.zeros_like(acc_ref)

    x = x_ref[...].astype(jnp.float32)  # (B, tn, tc), accumulate in f32
    if n_total % tn != 0:
        # Ragged final token tile: mask out-of-range tokens before the sum.
        tok = k * tn + jax.lax.broadcasted_iota(jnp.int32, x.shape, 1)
        x = jnp.where(tok < n_total, x, 0.0)
    acc_ref[...] += jnp.sum(x, axis=1)

    @pl.when(k == pl.num_programs(1) - 1)
    def _():
        o_ref[...] = (acc_ref[...] * (1.0 / n_total)).astype(o_ref.dtype)


def head_avg(x, *, tn=None, tc=None):
    B, N, C = x.shape
    dtype_bytes = jnp.dtype(x.dtype).itemsize
    if tc is None:
        tc = _choose_channel_tile(C)
    assert C % tc == 0, "channel tile must divide C"
    if tn is None:
        tn = _choose_token_tile(B, N, tc, dtype_bytes)
    grid = (C // tc, pl.cdiv(N, tn))

    kernel = functools.partial(_head_avg_kernel, n_total=N, tn=tn)
    return pl.pallas_call(
        kernel,
        out_shape=jax.ShapeDtypeStruct((B, C), x.dtype),
        grid_spec=pltpu.PrefetchScalarGridSpec(
            num_scalar_prefetch=0,
            grid=grid,
            in_specs=[pl.BlockSpec((B, tn, tc), lambda c, k: (0, k, c))],
            out_specs=pl.BlockSpec((B, tc), lambda c, k: (0, c)),
            scratch_shapes=[pltpu.VMEM((B, tc), jnp.float32)],
        ),
        compiler_params=pltpu.CompilerParams(
            # Channel axis is independent work (megacore-shardable on v7x);
            # token axis is the reduction and must stay "arbitrary" + last.
            dimension_semantics=("parallel", "arbitrary"),
        ),
    )(x)


# ---------------------------------------------------------------------------
# op='cls' : select token 0. Only a sublane-aligned window of the first
# min(N, 8) tokens is DMA'd per channel tile — ~N/8x less HBM traffic than
# copying the full tensor and no VMEM-capacity risk on any generation.
# ---------------------------------------------------------------------------
def _head_cls_kernel(x_ref, o_ref):
    # x_ref block is (B, tn, tc) covering tokens [0, tn); take token 0.
    o_ref[...] = x_ref[:, 0, :]


def head_cls(x, *, tc=None):
    B, N, C = x.shape
    if tc is None:
        tc = _choose_channel_tile(C)
    assert C % tc == 0, "channel tile must divide C"
    tn = N if N < 8 else 8  # sublane-aligned token window containing token 0
    grid = (C // tc,)
    return pl.pallas_call(
        _head_cls_kernel,
        out_shape=jax.ShapeDtypeStruct((B, C), x.dtype),
        grid_spec=pltpu.PrefetchScalarGridSpec(
            num_scalar_prefetch=0,
            grid=grid,
            in_specs=[pl.BlockSpec((B, tn, tc), lambda c: (0, 0, c))],
            out_specs=pl.BlockSpec((B, tc), lambda c: (0, c)),
        ),
        compiler_params=pltpu.CompilerParams(
            dimension_semantics=("parallel",),
        ),
    )(x)


def head_forward(x, op="avg"):
    """JAX/Pallas equivalent of Head.forward."""
    if op == "avg":
        return head_avg(x)
    elif op == "cls":
        return head_cls(x)
    return x  # identity for any other op, same as the PyTorch module


if __name__ == "__main__":
    key = jax.random.PRNGKey(0)
    k0, k1, k2 = jax.random.split(key, 3)

    # --- Small default shapes (single-block path) ---
    B, N, C = 2, 8, 128
    x = jax.random.normal(k0, (B, N, C), dtype=jnp.float32)

    y_avg = head_forward(x, op="avg")
    jax.block_until_ready(y_avg)
    assert y_avg.shape == (B, C)
    assert jnp.allclose(y_avg, jnp.mean(x, axis=1), atol=1e-5, rtol=1e-5)

    y_cls = head_forward(x, op="cls")
    jax.block_until_ready(y_cls)
    assert y_cls.shape == (B, C)
    assert jnp.allclose(y_cls, x[:, 0], atol=1e-6, rtol=1e-6)

    # --- Exercise the tiled paths: 2 channel tiles + ragged token tiling ---
    B2, N2, C2 = 2, 20, 256
    x2 = jax.random.normal(k1, (B2, N2, C2), dtype=jnp.float32)

    y2_avg = head_avg(x2, tn=8)  # cdiv(20, 8) = 3 token tiles, last one masked
    jax.block_until_ready(y2_avg)
    assert jnp.allclose(y2_avg, jnp.mean(x2, axis=1), atol=1e-5, rtol=1e-5)

    y2_cls = head_cls(x2)        # 2 channel tiles, only 8 tokens DMA'd each
    jax.block_until_ready(y2_cls)
    assert jnp.allclose(y2_cls, x2[:, 0], atol=1e-6, rtol=1e-6)

    # --- Divisor-preferring token tiling (no masking path), bf16 accum in f32
    B3, N3, C3 = 2, 32, 256
    x3 = jax.random.normal(k2, (B3, N3, C3), dtype=jnp.bfloat16)
    y3_avg = head_avg(x3, tn=16)  # 2 exact token tiles per channel tile
    jax.block_until_ready(y3_avg)
    ref3 = jnp.mean(x3.astype(jnp.float32), axis=1).astype(jnp.bfloat16)
    assert jnp.allclose(
        y3_avg.astype(jnp.float32), ref3.astype(jnp.float32), atol=2e-2, rtol=2e-2
    )

    # Identity fall-through for any other op, same as the PyTorch module.
    y_id = head_forward(x, op="none")
    assert y_id is x

    print("KERNEL_OK")
</pallas_src>

<mosaic_0001>
module attributes {stable_mosaic.version = 11 : i64} {
  func.func @_head_avg_kernel(%arg0: i32, %arg1: i32, %arg2: memref<2x8x128xf32, #tpu.memory_space<vmem>>, %arg3: memref<2x128xf32, #tpu.memory_space<vmem>>, %arg4: memref<2x128xf32, #tpu.memory_space<vmem>>) attributes {dimension_semantics = [#tpu.dimension_semantics<parallel>, #tpu.dimension_semantics<arbitrary>], iteration_bounds = array<i64: 1, 1>, scalar_prefetch = 0 : i64, scratch_operands = 1 : i64, tpu.core_type = #tpu.core_type<tc>, window_params = [{transform_indices = @transform_0, window_bounds = array<i64: 2, 8, 128>}, {transform_indices = @transform_1, window_bounds = array<i64: 2, 128>}]} {
    %c0_i32 = arith.constant 0 : i32
    %0 = arith.cmpi eq, %arg1, %c0_i32 : i32
    %1 = arith.extui %0 : i1 to i32
    %c0_i32_0 = arith.constant 0 : i32
    %2 = arith.cmpi ne, %1, %c0_i32_0 : i32
    scf.if %2 {
      %cst_9 = arith.constant 0.000000e+00 : f32
      %11 = vector.broadcast %cst_9 : f32 to vector<2x128xf32>
      %c0_10 = arith.constant 0 : index
      %c0_11 = arith.constant 0 : index
      %12 = vector.load %arg4[%c0_10, %c0_11] : memref<2x128xf32, #tpu.memory_space<vmem>>, vector<2x128xf32>
      tpu.vector_store %arg4[%c0_10, %c0_11], %11 {strides = array<i32>} : memref<2x128xf32, #tpu.memory_space<vmem>>, vector<2x128xf32>,
    } else {
    }
    %c0 = arith.constant 0 : index
    %c0_1 = arith.constant 0 : index
    %c0_2 = arith.constant 0 : index
    %3 = vector.load %arg2[%c0, %c0_1, %c0_2] : memref<2x8x128xf32, #tpu.memory_space<vmem>>, vector<2x8x128xf32>
    %c0_3 = arith.constant 0 : index
    %c0_4 = arith.constant 0 : index
    %4 = vector.load %arg4[%c0_3, %c0_4] : memref<2x128xf32, #tpu.memory_space<vmem>>, vector<2x128xf32>
    %cst = arith.constant dense<0.000000e+00> : vector<2x128xf32>
    %5 = vector.multi_reduction <add>, %3, %cst [1] : vector<2x8x128xf32> to vector<2x128xf32>
    %6 = arith.addf %4, %5 : vector<2x128xf32>
    %c0_5 = arith.constant 0 : index
    %c0_6 = arith.constant 0 : index
    %7 = vector.load %arg4[%c0_5, %c0_6] : memref<2x128xf32, #tpu.memory_space<vmem>>, vector<2x128xf32>
    tpu.vector_store %arg4[%c0_5, %c0_6], %6 {strides = array<i32>} : memref<2x128xf32, #tpu.memory_space<vmem>>, vector<2x128xf32>,
    %c0_i32_7 = arith.constant 0 : i32
    %8 = arith.cmpi eq, %arg1, %c0_i32_7 : i32
    %9 = arith.extui %8 : i1 to i32
    %c0_i32_8 = arith.constant 0 : i32
    %10 = arith.cmpi ne, %9, %c0_i32_8 : i32
    scf.if %10 {
      %c0_9 = arith.constant 0 : index
      %c0_10 = arith.constant 0 : index
      %11 = vector.load %arg4[%c0_9, %c0_10] : memref<2x128xf32, #tpu.memory_space<vmem>>, vector<2x128xf32>
      %cst_11 = arith.constant 1.250000e-01 : f32
      %12 = vector.broadcast %cst_11 : f32 to vector<2x128xf32>
      %13 = arith.mulf %11, %12 : vector<2x128xf32>
      %c0_12 = arith.constant 0 : index
      %c0_13 = arith.constant 0 : index
      %14 = vector.load %arg3[%c0_12, %c0_13] : memref<2x128xf32, #tpu.memory_space<vmem>>, vector<2x128xf32>
      tpu.vector_store %arg3[%c0_12, %c0_13], %13 {strides = array<i32>} : memref<2x128xf32, #tpu.memory_space<vmem>>, vector<2x128xf32>,
    } else {
    }
    return
  }
  func.func @transform_0(%arg0: i32, %arg1: i32) -> (i32, i32, i32) {
    %c0_i32 = arith.constant 0 : i32
    %c0_i32_0 = arith.constant 0 : i32
    return %c0_i32, %arg1, %arg0 : i32, i32, i32
  }
  func.func @transform_1(%arg0: i32, %arg1: i32) -> (i32, i32) {
    %c0_i32 = arith.constant 0 : i32
    %c0_i32_0 = arith.constant 0 : i32
    return %c0_i32, %arg0 : i32, i32
  }
}

</mosaic_0001>

<llo_original>
// kernel: tpu_custom_call.1
$region0: #{tpu_custom_call.1}
  #allocation0 [shape = 'u32[]', space=smem, size = 0x4, offset = 0x4, fixed_abs, tag = 'smem constant byte address 0x4 - core index']
  #allocation1 [shape = 'u32[144,128]{1,0:T(1,128)}', space=vmem, size = 0x12000, scoped, tag = 'internal scratch']
  #allocation2 [shape = 'f32[2,128]{1,0:T(2,128)}', space=vmem, size = 0x400, scoped, tag = 'scratch operand']
  %s0 = inlined_call_operand.hbm [shape: f32[2,8,128], index: 0, kind: input, shape index: {}]
  %s1 = inlined_call_operand.hbm [shape: f32[2,128], index: 1, kind: output, shape index: {}]
  %s2 = sld [smem:[#allocation0]]
  $region26: #{tpu_custom_call.1} parent=0
    _
  %s4 = ssub.s32 1, %s2
  %s5 = scalar_select 0, %s4, %s2
  $region1: #{tpu_custom_call.1} parent=0
    #allocation3 [shape = 'u8[8192]{0}', space=vmem, size = 0x2000, scoped, tag = 'input window, operand 0, single buffered']
    #allocation4 [shape = 's32[1]{0}', space=sflag, size = 0x4, scoped, tag = 'scoped memory for tpu_custom_call.1']
    #allocation5 [shape = 's32[1]{0}', space=sflag, size = 0x4, scoped, tag = 'scoped memory for tpu_custom_call.1']
    #allocation6 [shape = 'u8[1024]{0}', space=vmem, size = 0x400, scoped, tag = 'output window, operand 0, single buffered']
    %6 = vsyncpa [#allocation4], 0
    %7 = vsyncpa [#allocation5], 0
    // Predicated region
    $region2: #{tpu_custom_call.1} parent=1 // pred_check
      _
    $region3: #{tpu_custom_call.1} parent=1 // pred_check_branch
      %9 = sbr.rel (0) target = $region5
    $region4: #{tpu_custom_call.1} parent=1 // pred_region
      %s11 = ssub.s32 256, 256
      %12 = vsyncadd [#allocation4], %s11
      %s13 = sshll.u32 [#allocation3], 4
      %s14 = int_to_ptr.vmem [resolvable:$true] %s13
      %19 = dma.hbm_to_vmem [thread:$0]  %s0, 256, %s14, [#allocation4], 128, 128, 8
    $region5: #{tpu_custom_call.1} parent=1 // pred_fallthru
      _
    // Predicated region
    $region6: #{tpu_custom_call.1} parent=1 // pred_check
      _
    $region7: #{tpu_custom_call.1} parent=1 // pred_check_branch
      %21 = sbr.rel (0) target = $region9
    $region8: #{tpu_custom_call.1} parent=1 // pred_region
      %22 = dma.done [#allocation4], 256
    $region9: #{tpu_custom_call.1} parent=1 // pred_fallthru
      _
    %p23 = scmp.eq.s32.totalorder 0, 0
    // Predicated region
    $region10: #{tpu_custom_call.1} parent=1 // pred_check
      %p24 = pneg %p23
    $region11: #{tpu_custom_call.1} parent=1 // pred_check_branch
      %26 = sbr.rel (%p24) target = $region13
    $region12: #{tpu_custom_call.1} parent=1 // pred_region
      %27 = vst [vmem:[#allocation2] sm:$0x3] 0.0
    $region13: #{tpu_custom_call.1} parent=1 // pred_fallthru
      _
    %v28 = vld [vmem:[#allocation3] sm:$0xff]
    %v29 = vld [vmem:[#allocation3 + $0x8] sm:$0xff]
    %v30 = vld [vmem:[#allocation2] sm:$0x3]
    %v31 = vrot.slane %v28, 4
    %v32 = vadd.f32 %v28, %v31
    %v33 = vrot.slane %v32, 2
    %v34 = vadd.f32 %v32, %v33
    %v35 = vrot.slane %v34, 1
    %v36 = vadd.f32 %v34, %v35
    %v37 = vrot.slane %v29, 4
    %v38 = vadd.f32 %v29, %v37
    %v39 = vrot.slane %v38, 2
    %v40 = vadd.f32 %v38, %v39
    %v41 = vrot.slane %v40, 1
    %v42 = vadd.f32 %v40, %v41
    %vm45 = vcmask 1041409
    %v46 = vsel %vm45, %v42, %v36
    %v48 = vadd.f32 %v30, %v46
    %49 = vst [vmem:[#allocation2] sm:$0x3] %v48
    // Predicated region
    $region14: #{tpu_custom_call.1} parent=1 // pred_check
      %p50 = pneg %p23
    $region15: #{tpu_custom_call.1} parent=1 // pred_check_branch
      %52 = sbr.rel (%p50) target = $region17
    $region16: #{tpu_custom_call.1} parent=1 // pred_region
      %v53 = vld [vmem:[#allocation2] sm:$0x3]
      %v54 = vmul.f32 %v53, 0.125
      %55 = vst [vmem:[#allocation6] sm:$0x3] %v54
    $region17: #{tpu_custom_call.1} parent=1 // pred_fallthru
      _
    // Predicated region
    $region18: #{tpu_custom_call.1} parent=1 // pred_check
      _
    $region19: #{tpu_custom_call.1} parent=1 // pred_check_branch
      %57 = sbr.rel (0) target = $region21
    $region20: #{tpu_custom_call.1} parent=1 // pred_region
      %s59 = ssub.s32 32, 32
      %60 = vsyncadd [#allocation5], %s59
      %s62 = sshll.u32 [#allocation6], 4
      %s63 = int_to_ptr.vmem [resolvable:$true] %s62
      %65 = dma.vmem_to_hbm [thread:$0]  %s63, 32, %s1, [#allocation5]
    $region21: #{tpu_custom_call.1} parent=1 // pred_fallthru
      _
    // Predicated region
    $region22: #{tpu_custom_call.1} parent=1 // pred_check
      _
    $region23: #{tpu_custom_call.1} parent=1 // pred_check_branch
      %67 = sbr.rel (0) target = $region25
    $region24: #{tpu_custom_call.1} parent=1 // pred_region
      %68 = dma.done [#allocation5], 32
    $region25: #{tpu_custom_call.1} parent=1 // pred_fallthru
      _
    %69 = vsyncpa [#allocation4], 1
    %70 = vsyncpa [#allocation5], 1

</llo_original>
